<compile_context>
chip_gen: v7x
topology: tpu7x:2x2x1
jax: 0.10.0
libtpu: 0.0.40
codegen_flags: <defaults>
</compile_context>

<pallas_src>
import jax
import jax.numpy as jnp
from jax import lax
from jax.experimental import pallas as pl
from jax.experimental.pallas import tpu as pltpu

EPS = 1e-3


def conv1x1_bn_kernel(x_ref, w_ref, gb_ref, o_ref):
    # x_ref:  (Cin, M)        input channels x pixels (caller dtype, e.g. bf16)
    # w_ref:  (Cout_blk, Cin) conv weight block (caller dtype)
    # gb_ref: (Cout_blk, 2)   f32, column 0 = gamma, column 1 = beta
    # o_ref:  (Cout_blk, M)   f32 output block
    x = x_ref[...]
    w = w_ref[...]

    # 1x1 convolution == channel-major matmul on the MXU, f32 accumulation.
    y = jnp.dot(w, x, preferred_element_type=jnp.float32)        # (Cout_blk, M)

    # BatchNorm2d (training mode): batch statistics over the M = N*H*W pixels
    # per output channel (row), biased variance, eps = 0.001.
    # Two-pass centered variance in f32 for numerical robustness.
    inv_m = jnp.float32(1.0 / y.shape[1])
    mean = jnp.sum(y, axis=1, keepdims=True) * inv_m              # (Cout_blk, 1)
    centered = y - mean
    var = jnp.sum(centered * centered, axis=1, keepdims=True) * inv_m
    inv_std = lax.rsqrt(var + jnp.float32(EPS))

    gamma = gb_ref[:, 0:1]                                        # (Cout_blk, 1)
    beta = gb_ref[:, 1:2]                                         # (Cout_blk, 1)
    scale = gamma * inv_std
    o_ref[...] = centered * scale + beta


def _num_cout_blocks_default():
    # v7x has 2 TensorCores per chip -> split Cout across them.
    # v5e/v6e have 1 TC -> a second grid step is pure overhead at this size.
    try:
        kind = jax.devices()[0].device_kind.lower()
        if "v7" in kind:
            return 2
    except Exception:
        pass
    return 1


def conv1x1_bn(x_nchw, weight, gamma, beta, *, num_cout_blocks=None):
    """x_nchw: (N, Cin, H, W); weight: (Cout, Cin) or (Cout, Cin, 1, 1);
    gamma/beta: (Cout,). Returns (N, Cout, H, W) in float32."""
    N, Cin, H, W = x_nchw.shape
    Cout = weight.shape[0]
    M = N * H * W

    # Glue: NCHW -> (Cin, M).  For N == 1 this is a pure (free) reshape and
    # no dtype cast is materialized — the kernel reads the caller's dtype.
    if N == 1:
        x2d = x_nchw.reshape(Cin, M)
    else:
        # TODO(synk): for N > 1 fold this transpose into the kernel (3D blocks
        # / grid over N with sum+sumsq accumulation) instead of an XLA HBM
        # round trip.
        x2d = jnp.transpose(x_nchw, (1, 0, 2, 3)).reshape(Cin, M)

    w2d = weight.reshape(Cout, Cin)
    # gamma/beta merged into one small lane-dense f32 array (single tiny DMA).
    gb = jnp.stack(
        [gamma.astype(jnp.float32), beta.astype(jnp.float32)], axis=-1
    )  # (Cout, 2)

    flops = 2 * Cout * Cin * M
    bytes_accessed = (
        x2d.size * x2d.dtype.itemsize
        + w2d.size * w2d.dtype.itemsize
        + gb.size * 4
        + Cout * M * 4
    )
    cost = pl.CostEstimate(
        flops=flops, transcendentals=0, bytes_accessed=bytes_accessed
    )

    if num_cout_blocks is None:
        num_cout_blocks = _num_cout_blocks_default()
    if num_cout_blocks > 1 and Cout % (8 * num_cout_blocks) != 0:
        num_cout_blocks = 1

    # TODO(synk): if reused at much larger H*W, tile over M with a two-pass BN
    # (accumulate sum/sumsq in a (Cout,1) VMEM scratch across an "arbitrary" M
    # axis, finalize on the last step); keep the M tile <= ~4096 f32 (v7x has
    # only 64 MiB physical VMEM) and a multiple of 512 lanes for unmasked
    # stores.  At M = 49 the whole problem (<1 MiB) fits VMEM everywhere.
    if num_cout_blocks == 1:
        # Single block: no grid / index_map plumbing, full arrays in VMEM.
        out2d = pl.pallas_call(
            conv1x1_bn_kernel,
            out_shape=jax.ShapeDtypeStruct((Cout, M), jnp.float32),
            cost_estimate=cost,
        )(x2d, w2d, gb)
    else:
        cb = Cout // num_cout_blocks
        out2d = pl.pallas_call(
            conv1x1_bn_kernel,
            out_shape=jax.ShapeDtypeStruct((Cout, M), jnp.float32),
            grid=(num_cout_blocks,),
            in_specs=[
                pl.BlockSpec((Cin, M), lambda i: (0, 0)),   # x resident
                pl.BlockSpec((cb, Cin), lambda i: (i, 0)),  # weight block
                pl.BlockSpec((cb, 2), lambda i: (i, 0)),    # gamma/beta block
            ],
            out_specs=pl.BlockSpec((cb, M), lambda i: (i, 0)),
            compiler_params=pltpu.CompilerParams(
                dimension_semantics=("parallel",)
            ),
            cost_estimate=cost,
        )(x2d, w2d, gb)

    # Glue: (Cout, M) -> NCHW.  For N == 1 this is a pure (free) reshape.
    if N == 1:
        return out2d.reshape(1, Cout, H, W)
    return jnp.transpose(out2d.reshape(Cout, N, H, W), (1, 0, 2, 3))


if __name__ == "__main__":
    key = jax.random.PRNGKey(0)
    k_x, k_w, k_g, k_b = jax.random.split(key, 4)

    # Shapes implied by the module: input (1, 672, 7, 7), conv 672 -> 160.
    N, Cin, H, W, Cout = 1, 672, 7, 7, 160

    # Model-native bf16 activations/weights (halves HBM traffic into the MXU);
    # BN affine parameters stay f32.
    x = jax.random.normal(k_x, (N, Cin, H, W), dtype=jnp.float32).astype(jnp.bfloat16)
    weight = (jax.random.normal(k_w, (Cout, Cin), dtype=jnp.float32) * 0.05).astype(
        jnp.bfloat16
    )
    gamma = 1.0 + 0.1 * jax.random.normal(k_g, (Cout,), dtype=jnp.float32)
    beta = 0.1 * jax.random.normal(k_b, (Cout,), dtype=jnp.float32)

    out = conv1x1_bn(x, weight, gamma, beta)
    jax.block_until_ready(out)

    # Correctness check vs. a full-f32 JAX reference built from the same
    # (bf16-exact) values.
    # TODO(synk): running_mean/running_var updates of BatchNorm2d are stateful
    # and not reproduced (forward output only).
    xf = x.astype(jnp.float32)
    wf = weight.astype(jnp.float32)
    y_ref = jnp.einsum("nchw,oc->nohw", xf, wf, precision=lax.Precision.HIGHEST)
    mean = jnp.mean(y_ref, axis=(0, 2, 3), keepdims=True)
    var = jnp.mean((y_ref - mean) ** 2, axis=(0, 2, 3), keepdims=True)
    ref = (y_ref - mean) / jnp.sqrt(var + EPS) * gamma[None, :, None, None] + beta[
        None, :, None, None
    ]

    assert out.shape == (N, Cout, H, W)
    assert out.dtype == jnp.float32
    err = float(jnp.max(jnp.abs(out - ref)))
    assert err < 2e-3, f"max abs err {err}"

    print("KERNEL_OK")
</pallas_src>

<mosaic_0001>
module attributes {stable_mosaic.version = 11 : i64} {
  func.func @conv1x1_bn_kernel(%arg0: memref<672x49xbf16, #tpu.memory_space<vmem>>, %arg1: memref<160x672xbf16, #tpu.memory_space<vmem>>, %arg2: memref<160x2xf32, #tpu.memory_space<vmem>>, %arg3: memref<160x49xf32, #tpu.memory_space<vmem>>) attributes {dimension_semantics = [], scalar_prefetch = 0 : i64, scratch_operands = 0 : i64, tpu.core_type = #tpu.core_type<tc>} {
    %c0 = arith.constant 0 : index
    %c0_0 = arith.constant 0 : index
    %0 = vector.load %arg0[%c0, %c0_0] : memref<672x49xbf16, #tpu.memory_space<vmem>>, vector<672x49xbf16>
    %c0_1 = arith.constant 0 : index
    %c0_2 = arith.constant 0 : index
    %1 = vector.load %arg1[%c0_1, %c0_2] : memref<160x672xbf16, #tpu.memory_space<vmem>>, vector<160x672xbf16>
    %cst = arith.constant dense<0.000000e+00> : vector<160x49xf32>
    %2 = tpu.matmul %1, %0, %cst {dimension_numbers = #tpu.dot_dimension_numbers<[1], [0], [0], [1], [0, 0, 1, 1], [], []>} : vector<160x672xbf16>, vector<672x49xbf16>, vector<160x49xf32> -> vector<160x49xf32>
    %cst_3 = arith.constant dense<0.000000e+00> : vector<160xf32>
    %3 = vector.multi_reduction <add>, %2, %cst_3 [1] : vector<160x49xf32> to vector<160xf32>
    %4 = vector.shape_cast %3 : vector<160xf32> to vector<160x1xf32>
    %cst_4 = arith.constant 0.0204081628 : f32
    %5 = vector.broadcast %cst_4 : f32 to vector<160x1xf32>
    %6 = arith.mulf %4, %5 : vector<160x1xf32>
    %7 = vector.broadcast %6 : vector<160x1xf32> to vector<160x49xf32>
    %8 = arith.subf %2, %7 : vector<160x49xf32>
    %9 = arith.mulf %8, %8 : vector<160x49xf32>
    %cst_5 = arith.constant dense<0.000000e+00> : vector<160xf32>
    %10 = vector.multi_reduction <add>, %9, %cst_5 [1] : vector<160x49xf32> to vector<160xf32>
    %11 = vector.shape_cast %10 : vector<160xf32> to vector<160x1xf32>
    %cst_6 = arith.constant 0.0204081628 : f32
    %12 = vector.broadcast %cst_6 : f32 to vector<160x1xf32>
    %13 = arith.mulf %11, %12 : vector<160x1xf32>
    %cst_7 = arith.constant 1.000000e-03 : f32
    %14 = vector.broadcast %cst_7 : f32 to vector<160x1xf32>
    %15 = arith.addf %13, %14 : vector<160x1xf32>
    %16 = math.rsqrt %15 : vector<160x1xf32>
    %c0_8 = arith.constant 0 : index
    %c0_9 = arith.constant 0 : index
    %17 = vector.load %arg2[%c0_8, %c0_9] : memref<160x2xf32, #tpu.memory_space<vmem>>, vector<160x1xf32>
    %c0_10 = arith.constant 0 : index
    %c1 = arith.constant 1 : index
    %18 = vector.load %arg2[%c0_10, %c1] : memref<160x2xf32, #tpu.memory_space<vmem>>, vector<160x1xf32>
    %19 = arith.mulf %17, %16 : vector<160x1xf32>
    %20 = vector.broadcast %19 : vector<160x1xf32> to vector<160x49xf32>
    %21 = arith.mulf %8, %20 : vector<160x49xf32>
    %22 = vector.broadcast %18 : vector<160x1xf32> to vector<160x49xf32>
    %23 = arith.addf %21, %22 : vector<160x49xf32>
    %c0_11 = arith.constant 0 : index
    %c0_12 = arith.constant 0 : index
    %24 = vector.load %arg3[%c0_11, %c0_12] : memref<160x49xf32, #tpu.memory_space<vmem>>, vector<160x49xf32>
    tpu.vector_store %arg3[%c0_11, %c0_12], %23 {strides = array<i32>} : memref<160x49xf32, #tpu.memory_space<vmem>>, vector<160x49xf32>,
    return
  }
}

</mosaic_0001>

<llo_original>
// kernel: tpu_custom_call.1
$region0: #{tpu_custom_call.1}
  #allocation0 [shape = 'u32[]', space=smem, size = 0x4, offset = 0x4, fixed_abs, tag = 'smem constant byte address 0x4 - core index']
  #allocation1 [shape = 'u32[144,128]{1,0:T(1,128)}', space=vmem, size = 0x12000, scoped, tag = 'internal scratch']
  %s0 = inlined_call_operand.vmem [shape: bf16[672,49], index: 0, kind: input, shape index: {}]
  %s1 = inlined_call_operand.vmem [shape: bf16[160,672], index: 1, kind: input, shape index: {}]
  %s2 = inlined_call_operand.vmem [shape: f32[160,2], index: 2, kind: input, shape index: {}]
  %s3 = inlined_call_operand.vmem [shape: f32[160,49], index: 3, kind: output, shape index: {}]
  %s4 = sld [smem:[#allocation0]]
  $region22: #{tpu_custom_call.1} parent=0
    _
  %s6 = ssub.s32 1, %s4
  %s7 = scalar_select 0, %s6, %s4
  // Predicated region
  $region2: #{tpu_custom_call.1} parent=0 // pred_check
    _
  $region3: #{tpu_custom_call.1} parent=0 // pred_check_branch
    %9 = sbr.rel (0) target = $region5
  $region4: #{tpu_custom_call.1} parent=0 // pred_region
    _
  $region5: #{tpu_custom_call.1} parent=0 // pred_fallthru
    _
  // Predicated region
  $region6: #{tpu_custom_call.1} parent=0 // pred_check
    _
  $region7: #{tpu_custom_call.1} parent=0 // pred_check_branch
    %11 = sbr.rel (0) target = $region9
  $region8: #{tpu_custom_call.1} parent=0 // pred_region
    _
  $region9: #{tpu_custom_call.1} parent=0 // pred_fallthru
    _
  // Predicated region
  $region10: #{tpu_custom_call.1} parent=0 // pred_check
    _
  $region11: #{tpu_custom_call.1} parent=0 // pred_check_branch
    %13 = sbr.rel (0) target = $region13
  $region12: #{tpu_custom_call.1} parent=0 // pred_region
    _
  $region13: #{tpu_custom_call.1} parent=0 // pred_fallthru
    _
  %v15 = vld [vmem:[%s0] sm:$0xf]
  %v16 = vld [vmem:[%s0 + $0x4] sm:$0xf]
  %v17 = vld [vmem:[%s0 + $0x8] sm:$0xf]
  %v18 = vld [vmem:[%s0 + $0xc] sm:$0xf]
  %v19 = vld [vmem:[%s0 + $0x10] sm:$0xf]
  %v20 = vld [vmem:[%s0 + $0x14] sm:$0xf]
  %v21 = vld [vmem:[%s0 + $0x18] sm:$0xf]
  %v22 = vld [vmem:[%s0 + $0x1c] sm:$0xf]
  %v23 = vld [vmem:[%s0 + $0x20] sm:$0xf]
  %v24 = vld [vmem:[%s0 + $0x24] sm:$0xf]
  %v25 = vld [vmem:[%s0 + $0x28] sm:$0xf]
  %v26 = vld [vmem:[%s0 + $0x2c] sm:$0xf]
  %v27 = vld [vmem:[%s0 + $0x30] sm:$0xf]
  %v28 = vld [vmem:[%s0 + $0x34] sm:$0xf]
  %v29 = vld [vmem:[%s0 + $0x38] sm:$0xf]
  %v30 = vld [vmem:[%s0 + $0x3c] sm:$0xf]
  %v31 = vld [vmem:[%s0 + $0x40] sm:$0xf]
  %v32 = vld [vmem:[%s0 + $0x44] sm:$0xf]
  %v33 = vld [vmem:[%s0 + $0x48] sm:$0xf]
  %v34 = vld [vmem:[%s0 + $0x4c] sm:$0xf]
  %v35 = vld [vmem:[%s0 + $0x50] sm:$0xf]
  %v36 = vld [vmem:[%s0 + $0x54] sm:$0xf]
  %v37 = vld [vmem:[%s0 + $0x58] sm:$0xf]
  %v38 = vld [vmem:[%s0 + $0x5c] sm:$0xf]
  %v39 = vld [vmem:[%s0 + $0x60] sm:$0xf]
  %v40 = vld [vmem:[%s0 + $0x64] sm:$0xf]
  %v41 = vld [vmem:[%s0 + $0x68] sm:$0xf]
  %v42 = vld [vmem:[%s0 + $0x6c] sm:$0xf]
  %v43 = vld [vmem:[%s0 + $0x70] sm:$0xf]
  %v44 = vld [vmem:[%s0 + $0x74] sm:$0xf]
  %v45 = vld [vmem:[%s0 + $0x78] sm:$0xf]
  %v46 = vld [vmem:[%s0 + $0x7c] sm:$0xf]
  %v47 = vld [vmem:[%s0 + $0x80] sm:$0xf]
  %v48 = vld [vmem:[%s0 + $0x84] sm:$0xf]
  %v49 = vld [vmem:[%s0 + $0x88] sm:$0xf]
  %v50 = vld [vmem:[%s0 + $0x8c] sm:$0xf]
  %v51 = vld [vmem:[%s0 + $0x90] sm:$0xf]
  %v52 = vld [vmem:[%s0 + $0x94] sm:$0xf]
  %v53 = vld [vmem:[%s0 + $0x98] sm:$0xf]
  %v54 = vld [vmem:[%s0 + $0x9c] sm:$0xf]
  %v55 = vld [vmem:[%s0 + $0xa0] sm:$0xf]
  %v56 = vld [vmem:[%s0 + $0xa4] sm:$0xf]
  %v57 = vld [vmem:[%s0 + $0xa8] sm:$0xf]
  %v58 = vld [vmem:[%s0 + $0xac] sm:$0xf]
  %v59 = vld [vmem:[%s0 + $0xb0] sm:$0xf]
  %v60 = vld [vmem:[%s0 + $0xb4] sm:$0xf]
  %v61 = vld [vmem:[%s0 + $0xb8] sm:$0xf]
  %v62 = vld [vmem:[%s0 + $0xbc] sm:$0xf]
  %v63 = vld [vmem:[%s0 + $0xc0] sm:$0xf]
  %v64 = vld [vmem:[%s0 + $0xc4] sm:$0xf]
  %v65 = vld [vmem:[%s0 + $0xc8] sm:$0xf]
  %v66 = vld [vmem:[%s0 + $0xcc] sm:$0xf]
  %v67 = vld [vmem:[%s0 + $0xd0] sm:$0xf]
  %v68 = vld [vmem:[%s0 + $0xd4] sm:$0xf]
  %v69 = vld [vmem:[%s0 + $0xd8] sm:$0xf]
  %v70 = vld [vmem:[%s0 + $0xdc] sm:$0xf]
  %v71 = vld [vmem:[%s0 + $0xe0] sm:$0xf]
  %v72 = vld [vmem:[%s0 + $0xe4] sm:$0xf]
  %v73 = vld [vmem:[%s0 + $0xe8] sm:$0xf]
  %v74 = vld [vmem:[%s0 + $0xec] sm:$0xf]
  %v75 = vld [vmem:[%s0 + $0xf0] sm:$0xf]
  %v76 = vld [vmem:[%s0 + $0xf4] sm:$0xf]
  %v77 = vld [vmem:[%s0 + $0xf8] sm:$0xf]
  %v78 = vld [vmem:[%s0 + $0xfc] sm:$0xf]
  %v79 = vld [vmem:[%s0 + $0x100] sm:$0xf]
  %v80 = vld [vmem:[%s0 + $0x104] sm:$0xf]
  %v81 = vld [vmem:[%s0 + $0x108] sm:$0xf]
  %v82 = vld [vmem:[%s0 + $0x10c] sm:$0xf]
  %v83 = vld [vmem:[%s0 + $0x110] sm:$0xf]
  %v84 = vld [vmem:[%s0 + $0x114] sm:$0xf]
  %v85 = vld [vmem:[%s0 + $0x118] sm:$0xf]
  %v86 = vld [vmem:[%s0 + $0x11c] sm:$0xf]
  %v87 = vld [vmem:[%s0 + $0x120] sm:$0xf]
  %v88 = vld [vmem:[%s0 + $0x124] sm:$0xf]
  %v89 = vld [vmem:[%s0 + $0x128] sm:$0xf]
  %v90 = vld [vmem:[%s0 + $0x12c] sm:$0xf]
  %v91 = vld [vmem:[%s0 + $0x130] sm:$0xf]
  %v92 = vld [vmem:[%s0 + $0x134] sm:$0xf]
  %v93 = vld [vmem:[%s0 + $0x138] sm:$0xf]
  %v94 = vld [vmem:[%s0 + $0x13c] sm:$0xf]
  %v95 = vld [vmem:[%s0 + $0x140] sm:$0xf]
  %v96 = vld [vmem:[%s0 + $0x144] sm:$0xf]
  %v97 = vld [vmem:[%s0 + $0x148] sm:$0xf]
  %v98 = vld [vmem:[%s0 + $0x14c] sm:$0xf]
  %v99 = vld [vmem:[%s1] sm:$0xff]
  %v100 = vld [vmem:[%s1 + $0x8] sm:$0xff]
  %v101 = vld [vmem:[%s1 + $0x10] sm:$0xff]
  %v102 = vld [vmem:[%s1 + $0x18] sm:$0xff]
  %v103 = vld [vmem:[%s1 + $0x20] sm:$0xff]
  %v104 = vld [vmem:[%s1 + $0x28] sm:$0xff]
  %v105 = vld [vmem:[%s1 + $0x30] sm:$0xff]
  %v106 = vld [vmem:[%s1 + $0x38] sm:$0xff]
  %v107 = vld [vmem:[%s1 + $0x40] sm:$0xff]
  %v108 = vld [vmem:[%s1 + $0x48] sm:$0xff]
  %v109 = vld [vmem:[%s1 + $0x50] sm:$0xff]
  %v110 = vld [vmem:[%s1 + $0x58] sm:$0xff]
  %v111 = vld [vmem:[%s1 + $0x60] sm:$0xff]
  %v112 = vld [vmem:[%s1 + $0x68] sm:$0xff]
  %v113 = vld [vmem:[%s1 + $0x70] sm:$0xff]
  %v114 = vld [vmem:[%s1 + $0x78] sm:$0xff]
  %v115 = vld [vmem:[%s1 + $0x80] sm:$0xff]
  %v116 = vld [vmem:[%s1 + $0x88] sm:$0xff]
  %v117 = vld [vmem:[%s1 + $0x90] sm:$0xff]
  %v118 = vld [vmem:[%s1 + $0x98] sm:$0xff]
  %v119 = vld [vmem:[%s1 + $0xa0] sm:$0xff]
  %v120 = vld [vmem:[%s1 + $0xa8] sm:$0xff]
  %v121 = vld [vmem:[%s1 + $0xb0] sm:$0xff]
  %v122 = vld [vmem:[%s1 + $0xb8] sm:$0xff]
  %v123 = vld [vmem:[%s1 + $0xc0] sm:$0xff]
  %v124 = vld [vmem:[%s1 + $0xc8] sm:$0xff]
  %v125 = vld [vmem:[%s1 + $0xd0] sm:$0xff]
  %v126 = vld [vmem:[%s1 + $0xd8] sm:$0xff]
  %v127 = vld [vmem:[%s1 + $0xe0] sm:$0xff]
  %v128 = vld [vmem:[%s1 + $0xe8] sm:$0xff]
  %v129 = vld [vmem:[%s1 + $0xf0] sm:$0xff]
  %v130 = vld [vmem:[%s1 + $0xf8] sm:$0xff]
  %v131 = vld [vmem:[%s1 + $0x100] sm:$0xff]
  %v132 = vld [vmem:[%s1 + $0x108] sm:$0xff]
  %v133 = vld [vmem:[%s1 + $0x110] sm:$0xff]
  %v134 = vld [vmem:[%s1 + $0x118] sm:$0xff]
  %v135 = vld [vmem:[%s1 + $0x120] sm:$0xff]
  %v136 = vld [vmem:[%s1 + $0x128] sm:$0xff]
  %v137 = vld [vmem:[%s1 + $0x130] sm:$0xff]
  %v138 = vld [vmem:[%s1 + $0x138] sm:$0xff]
  %v139 = vld [vmem:[%s1 + $0x140] sm:$0xff]
  %v140 = vld [vmem:[%s1 + $0x148] sm:$0xff]
  %v141 = vld [vmem:[%s1 + $0x150] sm:$0xff]
  %v142 = vld [vmem:[%s1 + $0x158] sm:$0xff]
  %v143 = vld [vmem:[%s1 + $0x160] sm:$0xff]
  %v144 = vld [vmem:[%s1 + $0x168] sm:$0xff]
  %v145 = vld [vmem:[%s1 + $0x170] sm:$0xff]
  %v146 = vld [vmem:[%s1 + $0x178] sm:$0xff]
  %v147 = vld [vmem:[%s1 + $0x180] sm:$0xff]
  %v148 = vld [vmem:[%s1 + $0x188] sm:$0xff]
  %v149 = vld [vmem:[%s1 + $0x190] sm:$0xff]
  %v150 = vld [vmem:[%s1 + $0x198] sm:$0xff]
  %v151 = vld [vmem:[%s1 + $0x1a0] sm:$0xff]
  %v152 = vld [vmem:[%s1 + $0x1a8] sm:$0xff]
  %v153 = vld [vmem:[%s1 + $0x1b0] sm:$0xff]
  %v154 = vld [vmem:[%s1 + $0x1b8] sm:$0xff]
  %v155 = vld [vmem:[%s1 + $0x1c0] sm:$0xff]
  %v156 = vld [vmem:[%s1 + $0x1c8] sm:$0xff]
  %v157 = vld [vmem:[%s1 + $0x1d0] sm:$0xff]
  %v158 = vld [vmem:[%s1 + $0x1d8] sm:$0xff]
  %v219 = vunpack.c.l.b16 %v99
  %v220 = vunpack.c.h.b16 %v99
  %v221 = vunpack.c.l.b16 %v100
  %v222 = vunpack.c.h.b16 %v100
  %v223 = vunpack.c.l.b16 %v101
  %v224 = vunpack.c.h.b16 %v101
  %v225 = vunpack.c.l.b16 %v102
  %v226 = vunpack.c.h.b16 %v102
  %v227 = vunpack.c.l.b16 %v103
  %v228 = vunpack.c.h.b16 %v103
  %v229 = vunpack.c.l.b16 %v104
  %v230 = vunpack.c.h.b16 %v104
  %v231 = vunpack.c.l.b16 %v105
  %v232 = vunpack.c.h.b16 %v105
  %v233 = vunpack.c.l.b16 %v106
  %v234 = vunpack.c.h.b16 %v106
  %v235 = vunpack.c.l.b16 %v107
  %v236 = vunpack.c.h.b16 %v107
  %v237 = vunpack.c.l.b16 %v108
  %v238 = vunpack.c.h.b16 %v108
  %v239 = vunpack.c.l.b16 %v109
  %v240 = vunpack.c.h.b16 %v109
  %v241 = vunpack.c.l.b16 %v110
  %v242 = vunpack.c.h.b16 %v110
  %v243 = vunpack.c.l.b16 %v111
  %v244 = vunpack.c.h.b16 %v111
  %v245 = vunpack.c.l.b16 %v112
  %v246 = vunpack.c.h.b16 %v112
  %v247 = vunpack.c.l.b16 %v113
  %v248 = vunpack.c.h.b16 %v113
  %v249 = vunpack.c.l.b16 %v114
  %v250 = vunpack.c.h.b16 %v114
  %v251 = vunpack.c.l.b16 %v115
  %v252 = vunpack.c.h.b16 %v115
  %v253 = vunpack.c.l.b16 %v116
  %v254 = vunpack.c.h.b16 %v116
  %v255 = vunpack.c.l.b16 %v117
  %v256 = vunpack.c.h.b16 %v117
  %v257 = vunpack.c.l.b16 %v118
  %v258 = vunpack.c.h.b16 %v118
  %v259 = vunpack.c.l.b16 %v119
  %v260 = vunpack.c.h.b16 %v119
  %v261 = vunpack.c.l.b16 %v120
  %v262 = vunpack.c.h.b16 %v120
  %v263 = vunpack.c.l.b16 %v121
  %v264 = vunpack.c.h.b16 %v121
  %v265 = vunpack.c.l.b16 %v122
  %v266 = vunpack.c.h.b16 %v122
  %v267 = vunpack.c.l.b16 %v123
  %v268 = vunpack.c.h.b16 %v123
  %v269 = vunpack.c.l.b16 %v124
  %v270 = vunpack.c.h.b16 %v124
  %v271 = vunpack.c.l.b16 %v125
  %v272 = vunpack.c.h.b16 %v125
  %v273 = vunpack.c.l.b16 %v126
  %v274 = vunpack.c.h.b16 %v126
  %v275 = vunpack.c.l.b16 %v127
  %v276 = vunpack.c.h.b16 %v127
  %v277 = vunpack.c.l.b16 %v128
  %v278 = vunpack.c.h.b16 %v128
  %v279 = vunpack.c.l.b16 %v129
  %v280 = vunpack.c.h.b16 %v129
  %v281 = vunpack.c.l.b16 %v130
  %v282 = vunpack.c.h.b16 %v130
  %v283 = vunpack.c.l.b16 %v131
  %v284 = vunpack.c.h.b16 %v131
  %v285 = vunpack.c.l.b16 %v132
  %v286 = vunpack.c.h.b16 %v132
  %v287 = vunpack.c.l.b16 %v133
  %v288 = vunpack.c.h.b16 %v133
  %v289 = vunpack.c.l.b16 %v134
  %v290 = vunpack.c.h.b16 %v134
  %v291 = vunpack.c.l.b16 %v135
  %v292 = vunpack.c.h.b16 %v135
  %v293 = vunpack.c.l.b16 %v136
  %v294 = vunpack.c.h.b16 %v136
  %v295 = vunpack.c.l.b16 %v137
  %v296 = vunpack.c.h.b16 %v137
  %v297 = vunpack.c.l.b16 %v138
  %v298 = vunpack.c.h.b16 %v138
  %v299 = vunpack.c.l.b16 %v139
  %v300 = vunpack.c.h.b16 %v139
  %v301 = vunpack.c.l.b16 %v140
  %v302 = vunpack.c.h.b16 %v140
  %v303 = vunpack.c.l.b16 %v141
  %v304 = vunpack.c.h.b16 %v141
  %v305 = vunpack.c.l.b16 %v142
  %v306 = vunpack.c.h.b16 %v142
  %v307 = vunpack.c.l.b16 %v143
  %v308 = vunpack.c.h.b16 %v143
  %v309 = vunpack.c.l.b16 %v144
  %v310 = vunpack.c.h.b16 %v144
  %v311 = vunpack.c.l.b16 %v145
  %v312 = vunpack.c.h.b16 %v145
  %v313 = vunpack.c.l.b16 %v146
  %v314 = vunpack.c.h.b16 %v146
  %v315 = vunpack.c.l.b16 %v147
  %v316 = vunpack.c.h.b16 %v147
  %v317 = vunpack.c.l.b16 %v148
  %v318 = vunpack.c.h.b16 %v148
  %v319 = vunpack.c.l.b16 %v149
  %v320 = vunpack.c.h.b16 %v149
  %v321 = vunpack.c.l.b16 %v150
  %v322 = vunpack.c.h.b16 %v150
  %v323 = vunpack.c.l.b16 %v151
  %v324 = vunpack.c.h.b16 %v151
  %v325 = vunpack.c.l.b16 %v152
  %v326 = vunpack.c.h.b16 %v152
  %v327 = vunpack.c.l.b16 %v153
  %v328 = vunpack.c.h.b16 %v153
  %v329 = vunpack.c.l.b16 %v154
  %v330 = vunpack.c.h.b16 %v154
  %v331 = vunpack.c.l.b16 %v155
  %v332 = vunpack.c.h.b16 %v155
  %v333 = vunpack.c.l.b16 %v156
  %v334 = vunpack.c.h.b16 %v156
  %v335 = vunpack.c.l.b16 %v157
  %v336 = vunpack.c.h.b16 %v157
  %v337 = vunpack.c.l.b16 %v158
  %v338 = vunpack.c.h.b16 %v158
  %v339 = vpack.c.b16 %v225, %v219
  %v340 = vpack.c.b16 %v226, %v220
  %v341 = vpack.c.b16 %v227, %v221
  %v342 = vpack.c.b16 %v228, %v222
  %v343 = vpack.c.b16 %v229, %v223
  %v344 = vpack.c.b16 %v230, %v224
  %v345 = vpack.c.b16 %v237, %v231
  %v346 = vpack.c.b16 %v238, %v232
  %v347 = vpack.c.b16 %v239, %v233
  %v348 = vpack.c.b16 %v240, %v234
  %v349 = vpack.c.b16 %v241, %v235
  %v350 = vpack.c.b16 %v242, %v236
  %v351 = vpack.c.b16 %v249, %v243
  %v352 = vpack.c.b16 %v250, %v244
  %v353 = vpack.c.b16 %v251, %v245
  %v354 = vpack.c.b16 %v252, %v246
  %v355 = vpack.c.b16 %v253, %v247
  %v356 = vpack.c.b16 %v254, %v248
  %v357 = vpack.c.b16 %v261, %v255
  %v358 = vpack.c.b16 %v262, %v256
  %v359 = vpack.c.b16 %v263, %v257
  %v360 = vpack.c.b16 %v264, %v258
  %v361 = vpack.c.b16 %v265, %v259
  %v362 = vpack.c.b16 %v266, %v260
  %v363 = vpack.c.b16 %v273, %v267
  %v364 = vpack.c.b16 %v274, %v268
  %v365 = vpack.c.b16 %v275, %v269
  %v366 = vpack.c.b16 %v276, %v270
  %v367 = vpack.c.b16 %v277, %v271
  %v368 = vpack.c.b16 %v278, %v272
  %v369 = vpack.c.b16 %v285, %v279
  %v370 = vpack.c.b16 %v286, %v280
  %v371 = vpack.c.b16 %v287, %v281
  %v372 = vpack.c.b16 %v288, %v282
  %v373 = vpack.c.b16 %v289, %v283
  %v374 = vpack.c.b16 %v290, %v284
  %v375 = vpack.c.b16 %v297, %v291
  %v376 = vpack.c.b16 %v298, %v292
  %v377 = vpack.c.b16 %v299, %v293
  %v378 = vpack.c.b16 %v300, %v294
  %v379 = vpack.c.b16 %v301, %v295
  %v380 = vpack.c.b16 %v302, %v296
  %v381 = vpack.c.b16 %v309, %v303
  %v382 = vpack.c.b16 %v310, %v304
  %v383 = vpack.c.b16 %v311, %v305
  %v384 = vpack.c.b16 %v312, %v306
  %v385 = vpack.c.b16 %v313, %v307
  %v386 = vpack.c.b16 %v314, %v308
  %v387 = vpack.c.b16 %v321, %v315
  %v388 = vpack.c.b16 %v322, %v316
  %v389 = vpack.c.b16 %v323, %v317
  %v390 = vpack.c.b16 %v324, %v318
  %v391 = vpack.c.b16 %v325, %v319
  %v392 = vpack.c.b16 %v326, %v320
  %v393 = vpack.c.b16 %v333, %v327
  %v394 = vpack.c.b16 %v334, %v328
  %v395 = vpack.c.b16 %v335, %v329
  %v396 = vpack.c.b16 %v336, %v330
  %v397 = vpack.c.b16 %v337, %v331
  %v398 = vpack.c.b16 %v338, %v332
  %v533 = vunpack.c.l.b16 %v15
  %v534 = vunpack.c.l.b16 %v16
  %v535 = vunpack.c.l.b16 %v17
  %v536 = vunpack.c.l.b16 %v18
  %v537 = vunpack.c.l.b16 %v19
  %v538 = vunpack.c.l.b16 %v20
  %v539 = vunpack.c.l.b16 %v21
  %v540 = vunpack.c.l.b16 %v22
  %v541 = vunpack.c.l.b16 %v23
  %v542 = vunpack.c.l.b16 %v24
  %v543 = vunpack.c.l.b16 %v25
  %v544 = vunpack.c.l.b16 %v26
  %v545 = vunpack.c.l.b16 %v27
  %v546 = vunpack.c.l.b16 %v28
  %v547 = vunpack.c.l.b16 %v29
  %v548 = vunpack.c.l.b16 %v30
  %v549 = vunpack.c.l.b16 %v31
  %v550 = vunpack.c.l.b16 %v32
  %v551 = vunpack.c.l.b16 %v33
  %v552 = vunpack.c.l.b16 %v34
  %v553 = vunpack.c.l.b16 %v35
  %v554 = vunpack.c.l.b16 %v36
  %v555 = vunpack.c.l.b16 %v37
  %v556 = vunpack.c.l.b16 %v38
  %v557 = vunpack.c.l.b16 %v39
  %v558 = vunpack.c.l.b16 %v40
  %v559 = vunpack.c.l.b16 %v41
  %v560 = vunpack.c.l.b16 %v42
  %v561 = vunpack.c.l.b16 %v43
  %v562 = vunpack.c.l.b16 %v44
  %v563 = vunpack.c.l.b16 %v45
  %v564 = vunpack.c.l.b16 %v46
  %v565 = vunpack.c.l.b16 %v47
  %v566 = vunpack.c.l.b16 %v48
  %v567 = vunpack.c.l.b16 %v49
  %v568 = vunpack.c.l.b16 %v50
  %v569 = vunpack.c.l.b16 %v51
  %v570 = vunpack.c.l.b16 %v52
  %v571 = vunpack.c.l.b16 %v53
  %v572 = vunpack.c.l.b16 %v54
  %v573 = vunpack.c.l.b16 %v55
  %v574 = vunpack.c.l.b16 %v56
  %v575 = vunpack.c.l.b16 %v57
  %v576 = vunpack.c.l.b16 %v58
  %v577 = vunpack.c.l.b16 %v59
  %v578 = vunpack.c.l.b16 %v60
  %v579 = vunpack.c.l.b16 %v61
  %v580 = vunpack.c.l.b16 %v62
  %v581 = vunpack.c.l.b16 %v63
  %v582 = vunpack.c.l.b16 %v64
  %v583 = vunpack.c.l.b16 %v65
  %v584 = vunpack.c.l.b16 %v66
  %v585 = vunpack.c.l.b16 %v67
  %v586 = vunpack.c.l.b16 %v68
  %v587 = vunpack.c.l.b16 %v69
  %v588 = vunpack.c.l.b16 %v70
  %v589 = vunpack.c.l.b16 %v71
  %v590 = vunpack.c.l.b16 %v72
  %v591 = vunpack.c.l.b16 %v73
  %v592 = vunpack.c.l.b16 %v74
  %v593 = vunpack.c.l.b16 %v75
  %v594 = vunpack.c.l.b16 %v76
  %v595 = vunpack.c.l.b16 %v77
  %v596 = vunpack.c.l.b16 %v78
  %v597 = vunpack.c.l.b16 %v79
  %v598 = vunpack.c.l.b16 %v80
  %v599 = vunpack.c.l.b16 %v81
  %v600 = vunpack.c.l.b16 %v82
  %v601 = vunpack.c.l.b16 %v83
  %v602 = vunpack.c.l.b16 %v84
  %v603 = vunpack.c.l.b16 %v85
  %v604 = vunpack.c.l.b16 %v86
  %v605 = vunpack.c.l.b16 %v87
  %v606 = vunpack.c.l.b16 %v88
  %v607 = vunpack.c.l.b16 %v89
  %v608 = vunpack.c.l.b16 %v90
  %v609 = vunpack.c.l.b16 %v91
  %v610 = vunpack.c.l.b16 %v92
  %v611 = vunpack.c.l.b16 %v93
  %v612 = vunpack.c.l.b16 %v94
  %v613 = vunpack.c.l.b16 %v95
  %v614 = vunpack.c.l.b16 %v96
  %v615 = vunpack.c.l.b16 %v97
  %v616 = vunpack.c.l.b16 %v98
  %v617 = vpack.c.b16 %v534, %v533
  %v618 = vpack.c.b16 %v536, %v535
  %v619 = vpack.c.b16 %v538, %v537
  %v620 = vpack.c.b16 %v540, %v539
  %v621 = vpack.c.b16 %v542, %v541
  %v622 = vpack.c.b16 %v544, %v543
  %v623 = vpack.c.b16 %v546, %v545
  %v624 = vpack.c.b16 %v548, %v547
  %v625 = vpack.c.b16 %v550, %v549
  %v626 = vpack.c.b16 %v552, %v551
  %v627 = vpack.c.b16 %v554, %v553
  %v628 = vpack.c.b16 %v556, %v555
  %v629 = vpack.c.b16 %v558, %v557
  %v630 = vpack.c.b16 %v560, %v559
  %v631 = vpack.c.b16 %v562, %v561
  %v632 = vpack.c.b16 %v564, %v563
  %v633 = vpack.c.b16 %v566, %v565
  %v634 = vpack.c.b16 %v568, %v567
  %v635 = vpack.c.b16 %v570, %v569
  %v636 = vpack.c.b16 %v572, %v571
  %v637 = vpack.c.b16 %v574, %v573
  %v638 = vpack.c.b16 %v576, %v575
  %v639 = vpack.c.b16 %v578, %v577
  %v640 = vpack.c.b16 %v580, %v579
  %v641 = vpack.c.b16 %v582, %v581
  %v642 = vpack.c.b16 %v584, %v583
  %v643 = vpack.c.b16 %v586, %v585
  %v644 = vpack.c.b16 %v588, %v587
  %v645 = vpack.c.b16 %v590, %v589
  %v646 = vpack.c.b16 %v592, %v591
  %v647 = vpack.c.b16 %v594, %v593
  %v648 = vpack.c.b16 %v596, %v595
  %v649 = vpack.c.b16 %v598, %v597
  %v650 = vpack.c.b16 %v600, %v599
  %v651 = vpack.c.b16 %v602, %v601
  %v652 = vpack.c.b16 %v604, %v603
  %v653 = vpack.c.b16 %v606, %v605
  %v654 = vpack.c.b16 %v608, %v607
  %v655 = vpack.c.b16 %v610, %v609
  %v656 = vpack.c.b16 %v612, %v611
  %v657 = vpack.c.b16 %v614, %v613
  %v658 = vpack.c.b16 %v616, %v615
  %vm701 = vcmask 261120
  %v703 = vsel %vm701, %v344, 0
  %v706 = vsel %vm701, %v350, 0
  %v709 = vsel %vm701, %v356, 0
  %v712 = vsel %vm701, %v362, 0
  %v715 = vsel %vm701, %v368, 0
  %v718 = vsel %vm701, %v374, 0
  %v721 = vsel %vm701, %v380, 0
  %v724 = vsel %vm701, %v386, 0
  %v727 = vsel %vm701, %v392, 0
  %v730 = vsel %vm701, %v398, 0
  %732 = vmatprep.subr.bf16.mxu0 0
  %733 = vmatpush1.bf16.msra.mxu0 %v617
  %734 = vmatprep.subr.bf16.mxu0 0
  %735 = vmatpush1.bf16.msra.mxu0 %v618
  %736 = vmatprep.subr.bf16.mxu0 0
  %737 = vmatpush1.bf16.msra.mxu0 %v619
  %738 = vmatprep.subr.bf16.mxu0 0
  %739 = vmatpush1.bf16.msra.mxu0 %v620
  %740 = vmatprep.subr.bf16.mxu0 0
  %741 = vmatpush1.bf16.msra.mxu0 %v621
  %742 = vmatprep.subr.bf16.mxu0 0
  %743 = vmatpush1.bf16.msra.mxu0 %v622
  %744 = vmatprep.subr.bf16.mxu0 0
  %745 = vmatpush1.bf16.msra.mxu0 %v623
  %746 = vmatprep.subr.bf16.mxu0 0
  %747 = vmatpush1.bf16.msra.mxu0 %v624
  %748 = vmatprep.subr.bf16.mxu0 0
  %749 = vmatpush1.bf16.msra.mxu0 %v625
  %750 = vmatprep.subr.bf16.mxu0 0
  %751 = vmatpush1.bf16.msra.mxu0 %v626
  %752 = vmatprep.subr.bf16.mxu0 0
  %753 = vmatpush1.bf16.msra.mxu0 %v627
  %754 = vmatprep.subr.bf16.mxu0 0
  %755 = vmatpush1.bf16.msra.mxu0 %v628
  %756 = vmatprep.subr.bf16.mxu0 0
  %757 = vmatpush1.bf16.msra.mxu0 %v629
  %758 = vmatprep.subr.bf16.mxu0 0
  %759 = vmatpush1.bf16.msra.mxu0 %v630
  %760 = vmatprep.subr.bf16.mxu0 0
  %761 = vmatpush1.bf16.msra.mxu0 %v631
  %762 = vmatprep.subr.bf16.mxu0 0
  %763 = vmatpush1.bf16.msra.mxu0 %v632
  %764 = vmatprep.mubr.bf16.mxu0 %v340
  %765 = vmatmul.mubr.bf16.gmra.mrb[0].mxu0 %v339
  %v766 = vpop.f32.mrb[0].mxu0
  %v767 = vadd.f32 0.0, %v766
  %v768 = vpop.f32.mrb[0].mxu0
  %v769 = vpop.f32.mrb[0].mxu0
  %v770 = vadd.f32 0.0, %v769
  %v771 = vpop.f32.mrb[0].mxu0
  %772 = vmatprep.mubr.bf16.mxu0 %v346
  %773 = vmatmul.mubr.bf16.gmra.mrb[0].mxu0 %v345
  %v774 = vpop.f32.mrb[0].mxu0
  %v775 = vadd.f32 0.0, %v774
  %v776 = vpop.f32.mrb[0].mxu0
  %v777 = vpop.f32.mrb[0].mxu0
  %v778 = vadd.f32 0.0, %v777
  %v779 = vpop.f32.mrb[0].mxu0
  %780 = vmatprep.mubr.bf16.mxu0 %v352
  %781 = vmatmul.mubr.bf16.gmra.mrb[0].mxu0 %v351
  %v782 = vpop.f32.mrb[0].mxu0
  %v783 = vadd.f32 0.0, %v782
  %v784 = vpop.f32.mrb[0].mxu0
  %v785 = vpop.f32.mrb[0].mxu0
  %v786 = vadd.f32 0.0, %v785
  %v787 = vpop.f32.mrb[0].mxu0
  %788 = vmatprep.mubr.bf16.mxu0 %v358
  %789 = vmatmul.mubr.bf16.gmra.mrb[0].mxu0 %v357
  %v790 = vpop.f32.mrb[0].mxu0
  %v791 = vadd.f32 0.0, %v790
  %v792 = vpop.f32.mrb[0].mxu0
  %v793 = vpop.f32.mrb[0].mxu0
  %v794 = vadd.f32 0.0, %v793
  %v795 = vpop.f32.mrb[0].mxu0
  %796 = vmatprep.mubr.bf16.mxu0 %v364
  %797 = vmatmul.mubr.bf16.gmra.mrb[0].mxu0 %v363
  %v798 = vpop.f32.mrb[0].mxu0
  %v799 = vadd.f32 0.0, %v798
  %v800 = vpop.f32.mrb[0].mxu0
  %v801 = vpop.f32.mrb[0].mxu0
  %v802 = vadd.f32 0.0, %v801
  %v803 = vpop.f32.mrb[0].mxu0
  %804 = vmatprep.mubr.bf16.mxu0 %v370
  %805 = vmatmul.mubr.bf16.gmra.mrb[0].mxu0 %v369
  %v806 = vpop.f32.mrb[0].mxu0
  %v807 = vadd.f32 0.0, %v806
  %v808 = vpop.f32.mrb[0].mxu0
  %v809 = vpop.f32.mrb[0].mxu0
  %v810 = vadd.f32 0.0, %v809
  %v811 = vpop.f32.mrb[0].mxu0
  %812 = vmatprep.mubr.bf16.mxu0 %v376
  %813 = vmatmul.mubr.bf16.gmra.mrb[0].mxu0 %v375
  %v814 = vpop.f32.mrb[0].mxu0
  %v815 = vadd.f32 0.0, %v814
  %v816 = vpop.f32.mrb[0].mxu0
  %v817 = vpop.f32.mrb[0].mxu0
  %v818 = vadd.f32 0.0, %v817
  %v819 = vpop.f32.mrb[0].mxu0
  %820 = vmatprep.mubr.bf16.mxu0 %v382
  %821 = vmatmul.mubr.bf16.gmra.mrb[0].mxu0 %v381
  %v822 = vpop.f32.mrb[0].mxu0
  %v823 = vadd.f32 0.0, %v822
  %v824 = vpop.f32.mrb[0].mxu0
  %v825 = vpop.f32.mrb[0].mxu0
  %v826 = vadd.f32 0.0, %v825
  %v827 = vpop.f32.mrb[0].mxu0
  %828 = vmatprep.mubr.bf16.mxu0 %v388
  %829 = vmatmul.mubr.bf16.gmra.mrb[0].mxu0 %v387
  %v830 = vpop.f32.mrb[0].mxu0
  %v831 = vadd.f32 0.0, %v830
  %v832 = vpop.f32.mrb[0].mxu0
  %v833 = vpop.f32.mrb[0].mxu0
  %v834 = vadd.f32 0.0, %v833
  %v835 = vpop.f32.mrb[0].mxu0
  %836 = vmatprep.mubr.bf16.mxu0 %v394
  %837 = vmatmul.mubr.bf16.gmra.mrb[0].mxu0 %v393
  %v838 = vpop.f32.mrb[0].mxu0
  %v839 = vadd.f32 0.0, %v838
  %v840 = vpop.f32.mrb[0].mxu0
  %v841 = vpop.f32.mrb[0].mxu0
  %v842 = vadd.f32 0.0, %v841
  %v843 = vpop.f32.mrb[0].mxu0
  %844 = vdwg.mxu0
  %845 = vmatprep.subr.bf16.mxu0 0
  %846 = vmatpush1.bf16.msra.mxu0 %v633
  %847 = vmatprep.subr.bf16.mxu0 0
  %848 = vmatpush1.bf16.msra.mxu0 %v634
  %849 = vmatprep.subr.bf16.mxu0 0
  %850 = vmatpush1.bf16.msra.mxu0 %v635
  %851 = vmatprep.subr.bf16.mxu0 0
  %852 = vmatpush1.bf16.msra.mxu0 %v636
  %853 = vmatprep.subr.bf16.mxu0 0
  %854 = vmatpush1.bf16.msra.mxu0 %v637
  %855 = vmatprep.subr.bf16.mxu0 0
  %856 = vmatpush1.bf16.msra.mxu0 %v638
  %857 = vmatprep.subr.bf16.mxu0 0
  %858 = vmatpush1.bf16.msra.mxu0 %v639
  %859 = vmatprep.subr.bf16.mxu0 0
  %860 = vmatpush1.bf16.msra.mxu0 %v640
  %861 = vmatprep.subr.bf16.mxu0 0
  %862 = vmatpush1.bf16.msra.mxu0 %v641
  %863 = vmatprep.subr.bf16.mxu0 0
  %864 = vmatpush1.bf16.msra.mxu0 %v642
  %865 = vmatprep.subr.bf16.mxu0 0
  %866 = vmatpush1.bf16.msra.mxu0 %v643
  %867 = vmatprep.subr.bf16.mxu0 0
  %868 = vmatpush1.bf16.msra.mxu0 %v644
  %869 = vmatprep.subr.bf16.mxu0 0
  %870 = vmatpush1.bf16.msra.mxu0 %v645
  %871 = vmatprep.subr.bf16.mxu0 0
  %872 = vmatpush1.bf16.msra.mxu0 %v646
  %873 = vmatprep.subr.bf16.mxu0 0
  %874 = vmatpush1.bf16.msra.mxu0 %v647
  %875 = vmatprep.subr.bf16.mxu0 0
  %876 = vmatpush1.bf16.msra.mxu0 %v648
  %877 = vmatprep.mubr.bf16.mxu0 %v342
  %878 = vmatmul.mubr.bf16.gmra.mrb[0].mxu0 %v341
  %v879 = vpop.f32.mrb[0].mxu0
  %v880 = vadd.f32 %v767, %v879
  %v881 = vpop.f32.mrb[0].mxu0
  %v882 = vpop.f32.mrb[0].mxu0
  %v883 = vadd.f32 %v770, %v882
  %v884 = vpop.f32.mrb[0].mxu0
  %885 = vmatprep.mubr.bf16.mxu0 %v348
  %886 = vmatmul.mubr.bf16.gmra.mrb[0].mxu0 %v347
  %v887 = vpop.f32.mrb[0].mxu0
  %v888 = vadd.f32 %v775, %v887
  %v889 = vpop.f32.mrb[0].mxu0
  %v890 = vpop.f32.mrb[0].mxu0
  %v891 = vadd.f32 %v778, %v890
  %v892 = vpop.f32.mrb[0].mxu0
  %893 = vmatprep.mubr.bf16.mxu0 %v354
  %894 = vmatmul.mubr.bf16.gmra.mrb[0].mxu0 %v353
  %v895 = vpop.f32.mrb[0].mxu0
  %v896 = vadd.f32 %v783, %v895
  %v897 = vpop.f32.mrb[0].mxu0
  %v898 = vpop.f32.mrb[0].mxu0
  %v899 = vadd.f32 %v786, %v898
  %v900 = vpop.f32.mrb[0].mxu0
  %901 = vmatprep.mubr.bf16.mxu0 %v360
  %902 = vmatmul.mubr.bf16.gmra.mrb[0].mxu0 %v359
  %v903 = vpop.f32.mrb[0].mxu0
  %v904 = vadd.f32 %v791, %v903
  %v905 = vpop.f32.mrb[0].mxu0
  %v906 = vpop.f32.mrb[0].mxu0
  %v907 = vadd.f32 %v794, %v906
  %v908 = vpop.f32.mrb[0].mxu0
  %909 = vmatprep.mubr.bf16.mxu0 %v366
  %910 = vmatmul.mubr.bf16.gmra.mrb[0].mxu0 %v365
  %v911 = vpop.f32.mrb[0].mxu0
  %v912 = vadd.f32 %v799, %v911
  %v913 = vpop.f32.mrb[0].mxu0
  %v914 = vpop.f32.mrb[0].mxu0
  %v915 = vadd.f32 %v802, %v914
  %v916 = vpop.f32.mrb[0].mxu0
  %917 = vmatprep.mubr.bf16.mxu0 %v372
  %918 = vmatmul.mubr.bf16.gmra.mrb[0].mxu0 %v371
  %v919 = vpop.f32.mrb[0].mxu0
  %v920 = vadd.f32 %v807, %v919
  %v921 = vpop.f32.mrb[0].mxu0
  %v922 = vpop.f32.mrb[0].mxu0
  %v923 = vadd.f32 %v810, %v922
  %v924 = vpop.f32.mrb[0].mxu0
  %925 = vmatprep.mubr.bf16.mxu0 %v378
  %926 = vmatmul.mubr.bf16.gmra.mrb[0].mxu0 %v377
  %v927 = vpop.f32.mrb[0].mxu0
  %v928 = vadd.f32 %v815, %v927
  %v929 = vpop.f32.mrb[0].mxu0
  %v930 = vpop.f32.mrb[0].mxu0
  %v931 = vadd.f32 %v818, %v930
  %v932 = vpop.f32.mrb[0].mxu0
  %933 = vmatprep.mubr.bf16.mxu0 %v384
  %934 = vmatmul.mubr.bf16.gmra.mrb[0].mxu0 %v383
  %v935 = vpop.f32.mrb[0].mxu0
  %v936 = vadd.f32 %v823, %v935
  %v937 = vpop.f32.mrb[0].mxu0
  %v938 = vpop.f32.mrb[0].mxu0
  %v939 = vadd.f32 %v826, %v938
  %v940 = vpop.f32.mrb[0].mxu0
  %941 = vmatprep.mubr.bf16.mxu0 %v390
  %942 = vmatmul.mubr.bf16.gmra.mrb[0].mxu0 %v389
  %v943 = vpop.f32.mrb[0].mxu0
  %v944 = vadd.f32 %v831, %v943
  %v945 = vpop.f32.mrb[0].mxu0
  %v946 = vpop.f32.mrb[0].mxu0
  %v947 = vadd.f32 %v834, %v946
  %v948 = vpop.f32.mrb[0].mxu0
  %949 = vmatprep.mubr.bf16.mxu0 %v396
  %950 = vmatmul.mubr.bf16.gmra.mrb[0].mxu0 %v395
  %v951 = vpop.f32.mrb[0].mxu0
  %v952 = vadd.f32 %v839, %v951
  %v953 = vpop.f32.mrb[0].mxu0
  %v954 = vpop.f32.mrb[0].mxu0
  %v955 = vadd.f32 %v842, %v954
  %v956 = vpop.f32.mrb[0].mxu0
  %957 = vdwg.mxu0
  %958 = vmatprep.subr.bf16.mxu0 0
  %959 = vmatpush1.bf16.msra.mxu0 %v649
  %960 = vmatprep.subr.bf16.mxu0 0
  %961 = vmatpush1.bf16.msra.mxu0 %v650
  %962 = vmatprep.subr.bf16.mxu0 0
  %963 = vmatpush1.bf16.msra.mxu0 %v651
  %964 = vmatprep.subr.bf16.mxu0 0
  %965 = vmatpush1.bf16.msra.mxu0 %v652
  %966 = vmatprep.subr.bf16.mxu0 0
  %967 = vmatpush1.bf16.msra.mxu0 %v653
  %968 = vmatprep.subr.bf16.mxu0 0
  %969 = vmatpush1.bf16.msra.mxu0 %v654
  %970 = vmatprep.subr.bf16.mxu0 0
  %971 = vmatpush1.bf16.msra.mxu0 %v655
  %972 = vmatprep.subr.bf16.mxu0 0
  %973 = vmatpush1.bf16.msra.mxu0 %v656
  %974 = vmatprep.subr.bf16.mxu0 0
  %975 = vmatpush1.bf16.msra.mxu0 %v657
  %976 = vmatprep.subr.bf16.mxu0 0
  %977 = vmatpush1.bf16.msra.mxu0 %v658
  %978 = vmatprep.subr.bf16.mxu0 0
  %979 = vmatpush1.bf16.msra.mxu0 0
  %980 = vmatprep.subr.bf16.mxu0 0
  %981 = vmatpush1.bf16.msra.mxu0 0
  %982 = vmatprep.subr.bf16.mxu0 0
  %983 = vmatpush1.bf16.msra.mxu0 0
  %984 = vmatprep.subr.bf16.mxu0 0
  %985 = vmatpush1.bf16.msra.mxu0 0
  %986 = vmatprep.subr.bf16.mxu0 0
  %987 = vmatpush1.bf16.msra.mxu0 0
  %988 = vmatprep.subr.bf16.mxu0 0
  %989 = vmatpush1.bf16.msra.mxu0 0
  %990 = vmatprep.mubr.bf16.mxu0 %v703
  %991 = vmatmul.mubr.bf16.gmra.mrb[0].mxu0 %v343
  %v992 = vpop.f32.mrb[0].mxu0
  %v993 = vadd.f32 %v880, %v992
  %v994 = vpop.f32.mrb[0].mxu0
  %v995 = vpop.f32.mrb[0].mxu0
  %v996 = vadd.f32 %v883, %v995
  %v997 = vpop.f32.mrb[0].mxu0
  %998 = vmatprep.mubr.bf16.mxu0 %v706
  %999 = vmatmul.mubr.bf16.gmra.mrb[0].mxu0 %v349
  %v1000 = vpop.f32.mrb[0].mxu0
  %v1001 = vadd.f32 %v888, %v1000
  %v1002 = vpop.f32.mrb[0].mxu0
  %v1003 = vpop.f32.mrb[0].mxu0
  %v1004 = vadd.f32 %v891, %v1003
  %v1005 = vpop.f32.mrb[0].mxu0
  %1006 = vmatprep.mubr.bf16.mxu0 %v709
  %1007 = vmatmul.mubr.bf16.gmra.mrb[0].mxu0 %v355
  %v1008 = vpop.f32.mrb[0].mxu0
  %v1009 = vadd.f32 %v896, %v1008
  %v1010 = vpop.f32.mrb[0].mxu0
  %v1011 = vpop.f32.mrb[0].mxu0
  %v1012 = vadd.f32 %v899, %v1011
  %v1013 = vpop.f32.mrb[0].mxu0
  %1014 = vmatprep.mubr.bf16.mxu0 %v712
  %1015 = vmatmul.mubr.bf16.gmra.mrb[0].mxu0 %v361
  %v1016 = vpop.f32.mrb[0].mxu0
  %v1017 = vadd.f32 %v904, %v1016
  %v1018 = vpop.f32.mrb[0].mxu0
  %v1019 = vpop.f32.mrb[0].mxu0
  %v1020 = vadd.f32 %v907, %v1019
  %v1021 = vpop.f32.mrb[0].mxu0
  %1022 = vmatprep.mubr.bf16.mxu0 %v715
  %1023 = vmatmul.mubr.bf16.gmra.mrb[0].mxu0 %v367
  %v1024 = vpop.f32.mrb[0].mxu0
  %v1025 = vadd.f32 %v912, %v1024
  %v1026 = vpop.f32.mrb[0].mxu0
  %v1027 = vpop.f32.mrb[0].mxu0
  %v1028 = vadd.f32 %v915, %v1027
  %v1029 = vpop.f32.mrb[0].mxu0
  %1030 = vmatprep.mubr.bf16.mxu0 %v718
  %1031 = vmatmul.mubr.bf16.gmra.mrb[0].mxu0 %v373
  %v1032 = vpop.f32.mrb[0].mxu0
  %v1033 = vadd.f32 %v920, %v1032
  %v1034 = vpop.f32.mrb[0].mxu0
  %v1035 = vpop.f32.mrb[0].mxu0
  %v1036 = vadd.f32 %v923, %v1035
  %v1037 = vpop.f32.mrb[0].mxu0
  %1038 = vmatprep.mubr.bf16.mxu0 %v721
  %1039 = vmatmul.mubr.bf16.gmra.mrb[0].mxu0 %v379
  %v1040 = vpop.f32.mrb[0].mxu0
  %v1041 = vadd.f32 %v928, %v1040
  %v1042 = vpop.f32.mrb[0].mxu0
  %v1043 = vpop.f32.mrb[0].mxu0
  %v1044 = vadd.f32 %v931, %v1043
  %v1045 = vpop.f32.mrb[0].mxu0
  %1046 = vmatprep.mubr.bf16.mxu0 %v724
  %1047 = vmatmul.mubr.bf16.gmra.mrb[0].mxu0 %v385
  %v1048 = vpop.f32.mrb[0].mxu0
  %v1049 = vadd.f32 %v936, %v1048
  %v1050 = vpop.f32.mrb[0].mxu0
  %v1051 = vpop.f32.mrb[0].mxu0
  %v1052 = vadd.f32 %v939, %v1051
  %v1053 = vpop.f32.mrb[0].mxu0
  %1054 = vmatprep.mubr.bf16.mxu0 %v727
  %1055 = vmatmul.mubr.bf16.gmra.mrb[0].mxu0 %v391
  %v1056 = vpop.f32.mrb[0].mxu0
  %v1057 = vadd.f32 %v944, %v1056
  %v1058 = vpop.f32.mrb[0].mxu0
  %v1059 = vpop.f32.mrb[0].mxu0
  %v1060 = vadd.f32 %v947, %v1059
  %v1061 = vpop.f32.mrb[0].mxu0
  %1062 = vmatprep.mubr.bf16.mxu0 %v730
  %1063 = vmatmul.mubr.bf16.gmra.mrb[0].mxu0 %v397
  %v1064 = vpop.f32.mrb[0].mxu0
  %v1065 = vadd.f32 %v952, %v1064
  %v1066 = vpop.f32.mrb[0].mxu0
  %v1067 = vpop.f32.mrb[0].mxu0
  %v1068 = vadd.f32 %v955, %v1067
  %v1069 = vpop.f32.mrb[0].mxu0
  %1070 = vdwg.mxu0
  %vm1071 = vcmask 400384
  %v1072 = vsel %vm1071, %v993, 0.0
  %1073 = vadd.xlane.f32.xlu0 %v1072
  %v1074 = vpop.xlane.xlu0 %1073
  %v1075 = vsel %vm1071, %v996, 0.0
  %1076 = vadd.xlane.f32.xlu0 %v1075
  %v1077 = vpop.xlane.xlu0 %1076
  %v1078 = vsel %vm1071, %v1001, 0.0
  %1079 = vadd.xlane.f32.xlu0 %v1078
  %v1080 = vpop.xlane.xlu0 %1079
  %v1081 = vsel %vm1071, %v1004, 0.0
  %1082 = vadd.xlane.f32.xlu0 %v1081
  %v1083 = vpop.xlane.xlu0 %1082
  %v1084 = vsel %vm1071, %v1009, 0.0
  %1085 = vadd.xlane.f32.xlu0 %v1084
  %v1086 = vpop.xlane.xlu0 %1085
  %v1087 = vsel %vm1071, %v1012, 0.0
  %1088 = vadd.xlane.f32.xlu0 %v1087
  %v1089 = vpop.xlane.xlu0 %1088
  %v1090 = vsel %vm1071, %v1017, 0.0
  %1091 = vadd.xlane.f32.xlu0 %v1090
  %v1092 = vpop.xlane.xlu0 %1091
  %v1093 = vsel %vm1071, %v1020, 0.0
  %1094 = vadd.xlane.f32.xlu0 %v1093
  %v1095 = vpop.xlane.xlu0 %1094
  %v1096 = vsel %vm1071, %v1025, 0.0
  %1097 = vadd.xlane.f32.xlu0 %v1096
  %v1098 = vpop.xlane.xlu0 %1097
  %v1099 = vsel %vm1071, %v1028, 0.0
  %1100 = vadd.xlane.f32.xlu0 %v1099
  %v1101 = vpop.xlane.xlu0 %1100
  %v1102 = vsel %vm1071, %v1033, 0.0
  %1103 = vadd.xlane.f32.xlu0 %v1102
  %v1104 = vpop.xlane.xlu0 %1103
  %v1105 = vsel %vm1071, %v1036, 0.0
  %1106 = vadd.xlane.f32.xlu0 %v1105
  %v1107 = vpop.xlane.xlu0 %1106
  %v1108 = vsel %vm1071, %v1041, 0.0
  %1109 = vadd.xlane.f32.xlu0 %v1108
  %v1110 = vpop.xlane.xlu0 %1109
  %v1111 = vsel %vm1071, %v1044, 0.0
  %1112 = vadd.xlane.f32.xlu0 %v1111
  %v1113 = vpop.xlane.xlu0 %1112
  %v1114 = vsel %vm1071, %v1049, 0.0
  %1115 = vadd.xlane.f32.xlu0 %v1114
  %v1116 = vpop.xlane.xlu0 %1115
  %v1117 = vsel %vm1071, %v1052, 0.0
  %1118 = vadd.xlane.f32.xlu0 %v1117
  %v1119 = vpop.xlane.xlu0 %1118
  %v1120 = vsel %vm1071, %v1057, 0.0
  %1121 = vadd.xlane.f32.xlu0 %v1120
  %v1122 = vpop.xlane.xlu0 %1121
  %v1123 = vsel %vm1071, %v1060, 0.0
  %1124 = vadd.xlane.f32.xlu0 %v1123
  %v1125 = vpop.xlane.xlu0 %1124
  %v1126 = vsel %vm1071, %v1065, 0.0
  %1127 = vadd.xlane.f32.xlu0 %v1126
  %v1128 = vpop.xlane.xlu0 %1127
  %v1129 = vsel %vm1071, %v1068, 0.0
  %1130 = vadd.xlane.f32.xlu0 %v1129
  %v1131 = vpop.xlane.xlu0 %1130
  %v1132 = vmul.f32 %v1074, 0.020408163
  %v1133 = vmul.f32 %v1077, 0.020408163
  %v1134 = vmul.f32 %v1080, 0.020408163
  %v1135 = vmul.f32 %v1083, 0.020408163
  %v1136 = vmul.f32 %v1086, 0.020408163
  %v1137 = vmul.f32 %v1089, 0.020408163
  %v1138 = vmul.f32 %v1092, 0.020408163
  %v1139 = vmul.f32 %v1095, 0.020408163
  %v1140 = vmul.f32 %v1098, 0.020408163
  %v1141 = vmul.f32 %v1101, 0.020408163
  %v1142 = vmul.f32 %v1104, 0.020408163
  %v1143 = vmul.f32 %v1107, 0.020408163
  %v1144 = vmul.f32 %v1110, 0.020408163
  %v1145 = vmul.f32 %v1113, 0.020408163
  %v1146 = vmul.f32 %v1116, 0.020408163
  %v1147 = vmul.f32 %v1119, 0.020408163
  %v1148 = vmul.f32 %v1122, 0.020408163
  %v1149 = vmul.f32 %v1125, 0.020408163
  %v1150 = vmul.f32 %v1128, 0.020408163
  %v1151 = vmul.f32 %v1131, 0.020408163
  %v1152 = vsub.f32 %v993, %v1132
  %v1153 = vsub.f32 %v996, %v1133
  %v1154 = vsub.f32 %v1001, %v1134
  %v1155 = vsub.f32 %v1004, %v1135
  %v1156 = vsub.f32 %v1009, %v1136
  %v1157 = vsub.f32 %v1012, %v1137
  %v1158 = vsub.f32 %v1017, %v1138
  %v1159 = vsub.f32 %v1020, %v1139
  %v1160 = vsub.f32 %v1025, %v1140
  %v1161 = vsub.f32 %v1028, %v1141
  %v1162 = vsub.f32 %v1033, %v1142
  %v1163 = vsub.f32 %v1036, %v1143
  %v1164 = vsub.f32 %v1041, %v1144
  %v1165 = vsub.f32 %v1044, %v1145
  %v1166 = vsub.f32 %v1049, %v1146
  %v1167 = vsub.f32 %v1052, %v1147
  %v1168 = vsub.f32 %v1057, %v1148
  %v1169 = vsub.f32 %v1060, %v1149
  %v1170 = vsub.f32 %v1065, %v1150
  %v1171 = vsub.f32 %v1068, %v1151
  %v1172 = vmul.f32 %v1152, %v1152
  %v1173 = vmul.f32 %v1153, %v1153
  %v1174 = vmul.f32 %v1154, %v1154
  %v1175 = vmul.f32 %v1155, %v1155
  %v1176 = vmul.f32 %v1156, %v1156
  %v1177 = vmul.f32 %v1157, %v1157
  %v1178 = vmul.f32 %v1158, %v1158
  %v1179 = vmul.f32 %v1159, %v1159
  %v1180 = vmul.f32 %v1160, %v1160
  %v1181 = vmul.f32 %v1161, %v1161
  %v1182 = vmul.f32 %v1162, %v1162
  %v1183 = vmul.f32 %v1163, %v1163
  %v1184 = vmul.f32 %v1164, %v1164
  %v1185 = vmul.f32 %v1165, %v1165
  %v1186 = vmul.f32 %v1166, %v1166
  %v1187 = vmul.f32 %v1167, %v1167
  %v1188 = vmul.f32 %v1168, %v1168
  %v1189 = vmul.f32 %v1169, %v1169
  %v1190 = vmul.f32 %v1170, %v1170
  %v1191 = vmul.f32 %v1171, %v1171
  %v1192 = vsel %vm1071, %v1172, 0.0
  %1193 = vadd.xlane.f32.xlu0 %v1192
  %v1194 = vpop.xlane.xlu0 %1193
  %v1195 = vsel %vm1071, %v1173, 0.0
  %1196 = vadd.xlane.f32.xlu0 %v1195
  %v1197 = vpop.xlane.xlu0 %1196
  %v1198 = vsel %vm1071, %v1174, 0.0
  %1199 = vadd.xlane.f32.xlu0 %v1198
  %v1200 = vpop.xlane.xlu0 %1199
  %v1201 = vsel %vm1071, %v1175, 0.0
  %1202 = vadd.xlane.f32.xlu0 %v1201
  %v1203 = vpop.xlane.xlu0 %1202
  %v1204 = vsel %vm1071, %v1176, 0.0
  %1205 = vadd.xlane.f32.xlu0 %v1204
  %v1206 = vpop.xlane.xlu0 %1205
  %v1207 = vsel %vm1071, %v1177, 0.0
  %1208 = vadd.xlane.f32.xlu0 %v1207
  %v1209 = vpop.xlane.xlu0 %1208
  %v1210 = vsel %vm1071, %v1178, 0.0
  %1211 = vadd.xlane.f32.xlu0 %v1210
  %v1212 = vpop.xlane.xlu0 %1211
  %v1213 = vsel %vm1071, %v1179, 0.0
  %1214 = vadd.xlane.f32.xlu0 %v1213
  %v1215 = vpop.xlane.xlu0 %1214
  %v1216 = vsel %vm1071, %v1180, 0.0
  %1217 = vadd.xlane.f32.xlu0 %v1216
  %v1218 = vpop.xlane.xlu0 %1217
  %v1219 = vsel %vm1071, %v1181, 0.0
  %1220 = vadd.xlane.f32.xlu0 %v1219
  %v1221 = vpop.xlane.xlu0 %1220
  %v1222 = vsel %vm1071, %v1182, 0.0
  %1223 = vadd.xlane.f32.xlu0 %v1222
  %v1224 = vpop.xlane.xlu0 %1223
  %v1225 = vsel %vm1071, %v1183, 0.0
  %1226 = vadd.xlane.f32.xlu0 %v1225
  %v1227 = vpop.xlane.xlu0 %1226
  %v1228 = vsel %vm1071, %v1184, 0.0
  %1229 = vadd.xlane.f32.xlu0 %v1228
  %v1230 = vpop.xlane.xlu0 %1229
  %v1231 = vsel %vm1071, %v1185, 0.0
  %1232 = vadd.xlane.f32.xlu0 %v1231
  %v1233 = vpop.xlane.xlu0 %1232
  %v1234 = vsel %vm1071, %v1186, 0.0
  %1235 = vadd.xlane.f32.xlu0 %v1234
  %v1236 = vpop.xlane.xlu0 %1235
  %v1237 = vsel %vm1071, %v1187, 0.0
  %1238 = vadd.xlane.f32.xlu0 %v1237
  %v1239 = vpop.xlane.xlu0 %1238
  %v1240 = vsel %vm1071, %v1188, 0.0
  %1241 = vadd.xlane.f32.xlu0 %v1240
  %v1242 = vpop.xlane.xlu0 %1241
  %v1243 = vsel %vm1071, %v1189, 0.0
  %1244 = vadd.xlane.f32.xlu0 %v1243
  %v1245 = vpop.xlane.xlu0 %1244
  %v1246 = vsel %vm1071, %v1190, 0.0
  %1247 = vadd.xlane.f32.xlu0 %v1246
  %v1248 = vpop.xlane.xlu0 %1247
  %v1249 = vsel %vm1071, %v1191, 0.0
  %1250 = vadd.xlane.f32.xlu0 %v1249
  %v1251 = vpop.xlane.xlu0 %1250
  %v1252 = vmul.f32 %v1194, 0.020408163
  %v1253 = vmul.f32 %v1197, 0.020408163
  %v1254 = vmul.f32 %v1200, 0.020408163
  %v1255 = vmul.f32 %v1203, 0.020408163
  %v1256 = vmul.f32 %v1206, 0.020408163
  %v1257 = vmul.f32 %v1209, 0.020408163
  %v1258 = vmul.f32 %v1212, 0.020408163
  %v1259 = vmul.f32 %v1215, 0.020408163
  %v1260 = vmul.f32 %v1218, 0.020408163
  %v1261 = vmul.f32 %v1221, 0.020408163
  %v1262 = vmul.f32 %v1224, 0.020408163
  %v1263 = vmul.f32 %v1227, 0.020408163
  %v1264 = vmul.f32 %v1230, 0.020408163
  %v1265 = vmul.f32 %v1233, 0.020408163
  %v1266 = vmul.f32 %v1236, 0.020408163
  %v1267 = vmul.f32 %v1239, 0.020408163
  %v1268 = vmul.f32 %v1242, 0.020408163
  %v1269 = vmul.f32 %v1245, 0.020408163
  %v1270 = vmul.f32 %v1248, 0.020408163
  %v1271 = vmul.f32 %v1251, 0.020408163
  %v1272 = vadd.f32 %v1252, 0.001
  %v1273 = vadd.f32 %v1253, 0.001
  %v1274 = vadd.f32 %v1254, 0.001
  %v1275 = vadd.f32 %v1255, 0.001
  %v1276 = vadd.f32 %v1256, 0.001
  %v1277 = vadd.f32 %v1257, 0.001
  %v1278 = vadd.f32 %v1258, 0.001
  %v1279 = vadd.f32 %v1259, 0.001
  %v1280 = vadd.f32 %v1260, 0.001
  %v1281 = vadd.f32 %v1261, 0.001
  %v1282 = vadd.f32 %v1262, 0.001
  %v1283 = vadd.f32 %v1263, 0.001
  %v1284 = vadd.f32 %v1264, 0.001
  %v1285 = vadd.f32 %v1265, 0.001
  %v1286 = vadd.f32 %v1266, 0.001
  %v1287 = vadd.f32 %v1267, 0.001
  %v1288 = vadd.f32 %v1268, 0.001
  %v1289 = vadd.f32 %v1269, 0.001
  %v1290 = vadd.f32 %v1270, 0.001
  %v1291 = vadd.f32 %v1271, 0.001
  %v1292 = vrsqrt.pop %v1272
  %v1293 = vrsqrt.pop %v1273
  %v1294 = vrsqrt.pop %v1274
  %v1295 = vrsqrt.pop %v1275
  %v1296 = vrsqrt.pop %v1276
  %v1297 = vrsqrt.pop %v1277
  %v1298 = vrsqrt.pop %v1278
  %v1299 = vrsqrt.pop %v1279
  %v1300 = vrsqrt.pop %v1280
  %v1301 = vrsqrt.pop %v1281
  %v1302 = vrsqrt.pop %v1282
  %v1303 = vrsqrt.pop %v1283
  %v1304 = vrsqrt.pop %v1284
  %v1305 = vrsqrt.pop %v1285
  %v1306 = vrsqrt.pop %v1286
  %v1307 = vrsqrt.pop %v1287
  %v1308 = vrsqrt.pop %v1288
  %v1309 = vrsqrt.pop %v1289
  %v1310 = vrsqrt.pop %v1290
  %v1311 = vrsqrt.pop %v1291
  %v1312 = vld [vmem:[%s2] sm:$0xff]
  %v1313 = vld [vmem:[%s2 + $0x8] sm:$0xff]
  %v1314 = vld [vmem:[%s2 + $0x10] sm:$0xff]
  %v1315 = vld [vmem:[%s2 + $0x18] sm:$0xff]
  %v1316 = vld [vmem:[%s2 + $0x20] sm:$0xff]
  %v1317 = vld [vmem:[%s2 + $0x28] sm:$0xff]
  %v1318 = vld [vmem:[%s2 + $0x30] sm:$0xff]
  %v1319 = vld [vmem:[%s2 + $0x38] sm:$0xff]
  %v1320 = vld [vmem:[%s2 + $0x40] sm:$0xff]
  %v1321 = vld [vmem:[%s2 + $0x48] sm:$0xff]
  %v1322 = vld [vmem:[%s2 + $0x50] sm:$0xff]
  %v1323 = vld [vmem:[%s2 + $0x58] sm:$0xff]
  %v1324 = vld [vmem:[%s2 + $0x60] sm:$0xff]
  %v1325 = vld [vmem:[%s2 + $0x68] sm:$0xff]
  %v1326 = vld [vmem:[%s2 + $0x70] sm:$0xff]
  %v1327 = vld [vmem:[%s2 + $0x78] sm:$0xff]
  %v1328 = vld [vmem:[%s2 + $0x80] sm:$0xff]
  %v1329 = vld [vmem:[%s2 + $0x88] sm:$0xff]
  %v1330 = vld [vmem:[%s2 + $0x90] sm:$0xff]
  %v1331 = vld [vmem:[%s2 + $0x98] sm:$0xff]
  %v1332 = vmul.f32 %v1312, %v1292
  %v1333 = vmul.f32 %v1313, %v1293
  %v1334 = vmul.f32 %v1314, %v1294
  %v1335 = vmul.f32 %v1315, %v1295
  %v1336 = vmul.f32 %v1316, %v1296
  %v1337 = vmul.f32 %v1317, %v1297
  %v1338 = vmul.f32 %v1318, %v1298
  %v1339 = vmul.f32 %v1319, %v1299
  %v1340 = vmul.f32 %v1320, %v1300
  %v1341 = vmul.f32 %v1321, %v1301
  %v1342 = vmul.f32 %v1322, %v1302
  %v1343 = vmul.f32 %v1323, %v1303
  %v1344 = vmul.f32 %v1324, %v1304
  %v1345 = vmul.f32 %v1325, %v1305
  %v1346 = vmul.f32 %v1326, %v1306
  %v1347 = vmul.f32 %v1327, %v1307
  %v1348 = vmul.f32 %v1328, %v1308
  %v1349 = vmul.f32 %v1329, %v1309
  %v1350 = vmul.f32 %v1330, %v1310
  %v1351 = vmul.f32 %v1331, %v1311
  %1353 = vset.pattern.permute.xlu0 0
  %1354 = vperm.xlu0 %1353, %v1332
  %v1355 = vpop.permute.xlu0 %1354
  %1358 = vset.pattern.permute.xlu0 0
  %1359 = vperm.xlu0 %1358, %v1333
  %v1360 = vpop.permute.xlu0 %1359
  %1363 = vset.pattern.permute.xlu0 0
  %1364 = vperm.xlu0 %1363, %v1334
  %v1365 = vpop.permute.xlu0 %1364
  %1368 = vset.pattern.permute.xlu0 0
  %1369 = vperm.xlu0 %1368, %v1335
  %v1370 = vpop.permute.xlu0 %1369
  %1373 = vset.pattern.permute.xlu0 0
  %1374 = vperm.xlu0 %1373, %v1336
  %v1375 = vpop.permute.xlu0 %1374
  %1378 = vset.pattern.permute.xlu0 0
  %1379 = vperm.xlu0 %1378, %v1337
  %v1380 = vpop.permute.xlu0 %1379
  %1383 = vset.pattern.permute.xlu0 0
  %1384 = vperm.xlu0 %1383, %v1338
  %v1385 = vpop.permute.xlu0 %1384
  %1388 = vset.pattern.permute.xlu0 0
  %1389 = vperm.xlu0 %1388, %v1339
  %v1390 = vpop.permute.xlu0 %1389
  %1393 = vset.pattern.permute.xlu0 0
  %1394 = vperm.xlu0 %1393, %v1340
  %v1395 = vpop.permute.xlu0 %1394
  %1398 = vset.pattern.permute.xlu0 0
  %1399 = vperm.xlu0 %1398, %v1341
  %v1400 = vpop.permute.xlu0 %1399
  %1403 = vset.pattern.permute.xlu0 0
  %1404 = vperm.xlu0 %1403, %v1342
  %v1405 = vpop.permute.xlu0 %1404
  %1408 = vset.pattern.permute.xlu0 0
  %1409 = vperm.xlu0 %1408, %v1343
  %v1410 = vpop.permute.xlu0 %1409
  %1413 = vset.pattern.permute.xlu0 0
  %1414 = vperm.xlu0 %1413, %v1344
  %v1415 = vpop.permute.xlu0 %1414
  %1418 = vset.pattern.permute.xlu0 0
  %1419 = vperm.xlu0 %1418, %v1345
  %v1420 = vpop.permute.xlu0 %1419
  %1423 = vset.pattern.permute.xlu0 0
  %1424 = vperm.xlu0 %1423, %v1346
  %v1425 = vpop.permute.xlu0 %1424
  %1428 = vset.pattern.permute.xlu0 0
  %1429 = vperm.xlu0 %1428, %v1347
  %v1430 = vpop.permute.xlu0 %1429
  %1433 = vset.pattern.permute.xlu0 0
  %1434 = vperm.xlu0 %1433, %v1348
  %v1435 = vpop.permute.xlu0 %1434
  %1438 = vset.pattern.permute.xlu0 0
  %1439 = vperm.xlu0 %1438, %v1349
  %v1440 = vpop.permute.xlu0 %1439
  %1443 = vset.pattern.permute.xlu0 0
  %1444 = vperm.xlu0 %1443, %v1350
  %v1445 = vpop.permute.xlu0 %1444
  %1448 = vset.pattern.permute.xlu0 0
  %1449 = vperm.xlu0 %1448, %v1351
  %v1450 = vpop.permute.xlu0 %1449
  %v1452 = vmul.f32 %v1152, %v1355
  %v1453 = vmul.f32 %v1153, %v1360
  %v1454 = vmul.f32 %v1154, %v1365
  %v1455 = vmul.f32 %v1155, %v1370
  %v1456 = vmul.f32 %v1156, %v1375
  %v1457 = vmul.f32 %v1157, %v1380
  %v1458 = vmul.f32 %v1158, %v1385
  %v1459 = vmul.f32 %v1159, %v1390
  %v1460 = vmul.f32 %v1160, %v1395
  %v1461 = vmul.f32 %v1161, %v1400
  %v1462 = vmul.f32 %v1162, %v1405
  %v1463 = vmul.f32 %v1163, %v1410
  %v1464 = vmul.f32 %v1164, %v1415
  %v1465 = vmul.f32 %v1165, %v1420
  %v1466 = vmul.f32 %v1166, %v1425
  %v1467 = vmul.f32 %v1167, %v1430
  %v1468 = vmul.f32 %v1168, %v1435
  %v1469 = vmul.f32 %v1169, %v1440
  %v1470 = vmul.f32 %v1170, %v1445
  %v1471 = vmul.f32 %v1171, %v1450
  %1473 = vset.pattern.permute.xlu0 1
  %1474 = vperm.xlu0 %1473, %v1312
  %v1475 = vpop.permute.xlu0 %1474
  %1478 = vset.pattern.permute.xlu0 1
  %1479 = vperm.xlu0 %1478, %v1313
  %v1480 = vpop.permute.xlu0 %1479
  %1483 = vset.pattern.permute.xlu0 1
  %1484 = vperm.xlu0 %1483, %v1314
  %v1485 = vpop.permute.xlu0 %1484
  %1488 = vset.pattern.permute.xlu0 1
  %1489 = vperm.xlu0 %1488, %v1315
  %v1490 = vpop.permute.xlu0 %1489
  %1493 = vset.pattern.permute.xlu0 1
  %1494 = vperm.xlu0 %1493, %v1316
  %v1495 = vpop.permute.xlu0 %1494
  %1498 = vset.pattern.permute.xlu0 1
  %1499 = vperm.xlu0 %1498, %v1317
  %v1500 = vpop.permute.xlu0 %1499
  %1503 = vset.pattern.permute.xlu0 1
  %1504 = vperm.xlu0 %1503, %v1318
  %v1505 = vpop.permute.xlu0 %1504
  %1508 = vset.pattern.permute.xlu0 1
  %1509 = vperm.xlu0 %1508, %v1319
  %v1510 = vpop.permute.xlu0 %1509
  %1513 = vset.pattern.permute.xlu0 1
  %1514 = vperm.xlu0 %1513, %v1320
  %v1515 = vpop.permute.xlu0 %1514
  %1518 = vset.pattern.permute.xlu0 1
  %1519 = vperm.xlu0 %1518, %v1321
  %v1520 = vpop.permute.xlu0 %1519
  %1523 = vset.pattern.permute.xlu0 1
  %1524 = vperm.xlu0 %1523, %v1322
  %v1525 = vpop.permute.xlu0 %1524
  %1528 = vset.pattern.permute.xlu0 1
  %1529 = vperm.xlu0 %1528, %v1323
  %v1530 = vpop.permute.xlu0 %1529
  %1533 = vset.pattern.permute.xlu0 1
  %1534 = vperm.xlu0 %1533, %v1324
  %v1535 = vpop.permute.xlu0 %1534
  %1538 = vset.pattern.permute.xlu0 1
  %1539 = vperm.xlu0 %1538, %v1325
  %v1540 = vpop.permute.xlu0 %1539
  %1543 = vset.pattern.permute.xlu0 1
  %1544 = vperm.xlu0 %1543, %v1326
  %v1545 = vpop.permute.xlu0 %1544
  %1548 = vset.pattern.permute.xlu0 1
  %1549 = vperm.xlu0 %1548, %v1327
  %v1550 = vpop.permute.xlu0 %1549
  %1553 = vset.pattern.permute.xlu0 1
  %1554 = vperm.xlu0 %1553, %v1328
  %v1555 = vpop.permute.xlu0 %1554
  %1558 = vset.pattern.permute.xlu0 1
  %1559 = vperm.xlu0 %1558, %v1329
  %v1560 = vpop.permute.xlu0 %1559
  %1563 = vset.pattern.permute.xlu0 1
  %1564 = vperm.xlu0 %1563, %v1330
  %v1565 = vpop.permute.xlu0 %1564
  %1568 = vset.pattern.permute.xlu0 1
  %1569 = vperm.xlu0 %1568, %v1331
  %v1570 = vpop.permute.xlu0 %1569
  %v1572 = vadd.f32 %v1452, %v1475
  %v1573 = vadd.f32 %v1453, %v1480
  %v1574 = vadd.f32 %v1454, %v1485
  %v1575 = vadd.f32 %v1455, %v1490
  %v1576 = vadd.f32 %v1456, %v1495
  %v1577 = vadd.f32 %v1457, %v1500
  %v1578 = vadd.f32 %v1458, %v1505
  %v1579 = vadd.f32 %v1459, %v1510
  %v1580 = vadd.f32 %v1460, %v1515
  %v1581 = vadd.f32 %v1461, %v1520
  %v1582 = vadd.f32 %v1462, %v1525
  %v1583 = vadd.f32 %v1463, %v1530
  %v1584 = vadd.f32 %v1464, %v1535
  %v1585 = vadd.f32 %v1465, %v1540
  %v1586 = vadd.f32 %v1466, %v1545
  %v1587 = vadd.f32 %v1467, %v1550
  %v1588 = vadd.f32 %v1468, %v1555
  %v1589 = vadd.f32 %v1469, %v1560
  %v1590 = vadd.f32 %v1470, %v1565
  %v1591 = vadd.f32 %v1471, %v1570
  %1592 = vst.msk [vmem:[%s3] sm:$0xff] %vm1071, %v1572
  %1593 = vst.msk [vmem:[%s3 + $0x8] sm:$0xff] %vm1071, %v1573
  %1594 = vst.msk [vmem:[%s3 + $0x10] sm:$0xff] %vm1071, %v1574
  %1595 = vst.msk [vmem:[%s3 + $0x18] sm:$0xff] %vm1071, %v1575
  %1596 = vst.msk [vmem:[%s3 + $0x20] sm:$0xff] %vm1071, %v1576
  %1597 = vst.msk [vmem:[%s3 + $0x28] sm:$0xff] %vm1071, %v1577
  %1598 = vst.msk [vmem:[%s3 + $0x30] sm:$0xff] %vm1071, %v1578
  %1599 = vst.msk [vmem:[%s3 + $0x38] sm:$0xff] %vm1071, %v1579
  %1600 = vst.msk [vmem:[%s3 + $0x40] sm:$0xff] %vm1071, %v1580
  %1601 = vst.msk [vmem:[%s3 + $0x48] sm:$0xff] %vm1071, %v1581
  %1602 = vst.msk [vmem:[%s3 + $0x50] sm:$0xff] %vm1071, %v1582
  %1603 = vst.msk [vmem:[%s3 + $0x58] sm:$0xff] %vm1071, %v1583
  %1604 = vst.msk [vmem:[%s3 + $0x60] sm:$0xff] %vm1071, %v1584
  %1605 = vst.msk [vmem:[%s3 + $0x68] sm:$0xff] %vm1071, %v1585
  %1606 = vst.msk [vmem:[%s3 + $0x70] sm:$0xff] %vm1071, %v1586
  %1607 = vst.msk [vmem:[%s3 + $0x78] sm:$0xff] %vm1071, %v1587
  %1608 = vst.msk [vmem:[%s3 + $0x80] sm:$0xff] %vm1071, %v1588
  %1609 = vst.msk [vmem:[%s3 + $0x88] sm:$0xff] %vm1071, %v1589
  %1610 = vst.msk [vmem:[%s3 + $0x90] sm:$0xff] %vm1071, %v1590
  %1611 = vst.msk [vmem:[%s3 + $0x98] sm:$0xff] %vm1071, %v1591
  // Predicated region
  $region14: #{tpu_custom_call.1} parent=0 // pred_check
    _
  $region15: #{tpu_custom_call.1} parent=0 // pred_check_branch
    %1613 = sbr.rel (0) target = $region17
  $region16: #{tpu_custom_call.1} parent=0 // pred_region
    _
  $region17: #{tpu_custom_call.1} parent=0 // pred_fallthru
    _
  // Predicated region
  $region18: #{tpu_custom_call.1} parent=0 // pred_check
    _
  $region19: #{tpu_custom_call.1} parent=0 // pred_check_branch
    %1615 = sbr.rel (0) target = $region21
  $region20: #{tpu_custom_call.1} parent=0 // pred_region
    _
  $region21: #{tpu_custom_call.1} parent=0 // pred_fallthru
    _

</llo_original>
